<compile_context>
chip_gen: v5e
topology: v5e:2x2
jax: 0.10.0
libtpu: 0.0.40
codegen_flags: <defaults>
</compile_context>

<pallas_src>
import jax
import jax.numpy as jnp
from jax.experimental import pallas as pl
from jax.experimental.pallas import tpu as pltpu


def mlp_pool_kernel(x_ref, w1_ref, w2_ref, o_ref):
    # x_ref : (Bt, L, Dt)  batch-tile of x, D on the lane axis (native dtype)
    # w1_ref: (H1, L)      first Linear weight, PyTorch (out, in), no bias
    # w2_ref: (H2, H1)     second Linear weight, pre-scaled by 1/H2 (mean fold)
    # o_ref : (Bt, Dt)     lane-dense f32 output tile
    w1 = w1_ref[...]
    w2 = w2_ref[...]
    bt = x_ref.shape[0]

    rows = []
    for b in range(bt):                       # short static loop over the batch tile
        x_b = x_ref[b].astype(w1.dtype)                                   # (L, Dt)
        h1 = jnp.dot(w1, x_b, preferred_element_type=jnp.float32)         # (H1, Dt)
        h1 = jnp.maximum(h1, 0.0)                                         # ReLU, f32
        h2 = jnp.dot(w2, h1.astype(w2.dtype),
                     preferred_element_type=jnp.float32)                  # (H2, Dt)
        h2 = jnp.maximum(h2, 0.0)                                         # ReLU, f32
        # TODO(synk): training-mode dropout not implemented (identity at inference).
        rows.append(jnp.sum(h2, axis=0, keepdims=True))                   # (1, Dt)

    # One dense (Bt, Dt) store instead of Bt single-sublane partial stores.
    o_ref[...] = jnp.concatenate(rows, axis=0).astype(o_ref.dtype)


def mlp_pool(x, w1, w2, *, b_tile=8, d_tile=2048, compute_dtype=jnp.bfloat16):
    """MLPPool forward (eval mode).

    x : (B, L, D)      input, L == max_len (read in its native dtype)
    w1: (L//2, L)      first Linear weight, PyTorch (out, in), no bias
    w2: (L//4, L//2)   second Linear weight
    b_tile should be a multiple of 8 (sublane constraint when B > b_tile).
    Returns (B, D) float32.
    """
    B, L, D = x.shape
    H1 = w1.shape[0]
    H2 = w2.shape[0]

    # Lane tile: multiple of 128, clamped to D rounded up to 128.
    Dp = pl.cdiv(D, 128) * 128
    Dt = max(128, (min(d_tile, Dp) // 128) * 128)
    # Batch tile: either the full batch or a multiple-of-8 tile.
    Bt = min(b_tile, B)

    # Weights are tiny: cast once (and fold the 1/H2 mean scale into W2).
    w1c = w1.astype(compute_dtype)
    w2c = (w2.astype(jnp.float32) / float(H2)).astype(compute_dtype)

    return pl.pallas_call(
        mlp_pool_kernel,
        out_shape=jax.ShapeDtypeStruct((B, D), jnp.float32),
        grid=(pl.cdiv(B, Bt), pl.cdiv(D, Dt)),
        in_specs=[
            pl.BlockSpec((Bt, L, Dt), lambda b, d: (b, 0, d)),   # x tile (native dtype)
            pl.BlockSpec((H1, L), lambda b, d: (0, 0)),          # W1 (whole, const)
            pl.BlockSpec((H2, H1), lambda b, d: (0, 0)),         # W2 (whole, const)
        ],
        out_specs=pl.BlockSpec((Bt, Dt), lambda b, d: (b, d)),
        compiler_params=pltpu.CompilerParams(
            dimension_semantics=("parallel", "parallel")),
    )(x, w1c, w2c)


def mlp_pool_reference(x, w1, w2):
    """Pure-JAX f32 reference matching the PyTorch forward (eval mode)."""
    xt = jnp.transpose(x, (0, 2, 1)).astype(jnp.float32)          # (B, D, L)
    h1 = jnp.maximum(xt @ w1.astype(jnp.float32).T, 0.0)          # (B, D, L//2)
    h2 = jnp.maximum(h1 @ w2.astype(jnp.float32).T, 0.0)          # (B, D, L//4)
    return jnp.mean(h2, axis=-1)                                  # (B, D)


if __name__ == "__main__":
    max_len = 32

    key = jax.random.PRNGKey(0)
    k1, k2, kx1, kx2, kx3 = jax.random.split(key, 5)

    # PyTorch-style (out, in) weights, uniform(-1/sqrt(fan_in), 1/sqrt(fan_in)).
    bound1 = 1.0 / (max_len ** 0.5)
    w1 = jax.random.uniform(k1, (max_len // 2, max_len),
                            minval=-bound1, maxval=bound1, dtype=jnp.float32)
    bound2 = 1.0 / ((max_len // 2) ** 0.5)
    w2 = jax.random.uniform(k2, (max_len // 4, max_len // 2),
                            minval=-bound2, maxval=bound2, dtype=jnp.float32)

    # Case 1: lane-aligned D, f32 compute path — tight correctness check.
    x1 = jax.random.normal(kx1, (2, max_len, 128), dtype=jnp.float32)
    out1 = mlp_pool(x1, w1, w2, compute_dtype=jnp.float32)
    jax.block_until_ready(out1)
    ref1 = mlp_pool_reference(x1, w1, w2)
    assert out1.shape == (2, 128)
    assert jnp.allclose(out1, ref1, atol=1e-4, rtol=1e-4)

    # Case 2: ragged D (partial lane block, no padding pass) + bf16 fast path.
    x2 = jax.random.normal(kx2, (2, max_len, 200), dtype=jnp.float32)
    out2 = mlp_pool(x2, w1, w2, compute_dtype=jnp.bfloat16)
    jax.block_until_ready(out2)
    ref2 = mlp_pool_reference(x2, w1, w2)
    assert out2.shape == (2, 200)
    assert jnp.allclose(out2, ref2, atol=2e-2, rtol=2e-2)

    # Case 3: B > Bt (partial batch block) and multiple D tiles, f32 path.
    x3 = jax.random.normal(kx3, (10, max_len, 300), dtype=jnp.float32)
    out3 = mlp_pool(x3, w1, w2, b_tile=8, d_tile=128, compute_dtype=jnp.float32)
    jax.block_until_ready(out3)
    ref3 = mlp_pool_reference(x3, w1, w2)
    assert out3.shape == (10, 300)
    assert jnp.allclose(out3, ref3, atol=1e-4, rtol=1e-4)

    print("KERNEL_OK")
</pallas_src>

<mosaic_0001>
module attributes {stable_mosaic.version = 11 : i64} {
  func.func @mlp_pool_kernel(%arg0: i32, %arg1: i32, %arg2: memref<2x32x128xf32, #tpu.memory_space<vmem>>, %arg3: memref<16x32xf32, #tpu.memory_space<vmem>>, %arg4: memref<8x16xf32, #tpu.memory_space<vmem>>, %arg5: memref<2x128xf32, #tpu.memory_space<vmem>>) attributes {dimension_semantics = [#tpu.dimension_semantics<parallel>, #tpu.dimension_semantics<parallel>], iteration_bounds = array<i64: 1, 1>, scalar_prefetch = 0 : i64, scratch_operands = 0 : i64, tpu.core_type = #tpu.core_type<tc>, window_params = [{transform_indices = @transform_0, window_bounds = array<i64: 2, 32, 128>}, {pipeline_mode = #tpu.pipeline_mode<synchronous>, transform_indices = @transform_1, window_bounds = array<i64: 16, 32>}, {pipeline_mode = #tpu.pipeline_mode<synchronous>, transform_indices = @transform_2, window_bounds = array<i64: 8, 16>}, {transform_indices = @transform_3, window_bounds = array<i64: 2, 128>}]} {
    %c0 = arith.constant 0 : index
    %c0_0 = arith.constant 0 : index
    %0 = vector.load %arg3[%c0, %c0_0] : memref<16x32xf32, #tpu.memory_space<vmem>>, vector<16x32xf32>
    %c0_1 = arith.constant 0 : index
    %c0_2 = arith.constant 0 : index
    %1 = vector.load %arg4[%c0_1, %c0_2] : memref<8x16xf32, #tpu.memory_space<vmem>>, vector<8x16xf32>
    %c0_3 = arith.constant 0 : index
    %c0_4 = arith.constant 0 : index
    %c0_5 = arith.constant 0 : index
    %2 = vector.load %arg2[%c0_3, %c0_4, %c0_5] : memref<2x32x128xf32, #tpu.memory_space<vmem>>, vector<1x32x128xf32>
    %3 = vector.shape_cast %2 : vector<1x32x128xf32> to vector<32x128xf32>
    %cst = arith.constant dense<0.000000e+00> : vector<16x128xf32>
    %4 = tpu.matmul %0, %3, %cst {dimension_numbers = #tpu.dot_dimension_numbers<[1], [0], [0], [1], [0, 0, 1, 1], [], []>} : vector<16x32xf32>, vector<32x128xf32>, vector<16x128xf32> -> vector<16x128xf32>
    %cst_6 = arith.constant 0.000000e+00 : f32
    %5 = vector.broadcast %cst_6 : f32 to vector<16x128xf32>
    %6 = arith.maximumf %4, %5 : vector<16x128xf32>
    %cst_7 = arith.constant dense<0.000000e+00> : vector<8x128xf32>
    %7 = tpu.matmul %1, %6, %cst_7 {dimension_numbers = #tpu.dot_dimension_numbers<[1], [0], [0], [1], [0, 0, 1, 1], [], []>} : vector<8x16xf32>, vector<16x128xf32>, vector<8x128xf32> -> vector<8x128xf32>
    %cst_8 = arith.constant 0.000000e+00 : f32
    %8 = vector.broadcast %cst_8 : f32 to vector<8x128xf32>
    %9 = arith.maximumf %7, %8 : vector<8x128xf32>
    %cst_9 = arith.constant dense<0.000000e+00> : vector<128xf32>
    %10 = vector.multi_reduction <add>, %9, %cst_9 [0] : vector<8x128xf32> to vector<128xf32>
    %11 = vector.shape_cast %10 : vector<128xf32> to vector<1x128xf32>
    %c1 = arith.constant 1 : index
    %c0_10 = arith.constant 0 : index
    %c0_11 = arith.constant 0 : index
    %12 = vector.load %arg2[%c1, %c0_10, %c0_11] : memref<2x32x128xf32, #tpu.memory_space<vmem>>, vector<1x32x128xf32>
    %13 = vector.shape_cast %12 : vector<1x32x128xf32> to vector<32x128xf32>
    %cst_12 = arith.constant dense<0.000000e+00> : vector<16x128xf32>
    %14 = tpu.matmul %0, %13, %cst_12 {dimension_numbers = #tpu.dot_dimension_numbers<[1], [0], [0], [1], [0, 0, 1, 1], [], []>} : vector<16x32xf32>, vector<32x128xf32>, vector<16x128xf32> -> vector<16x128xf32>
    %cst_13 = arith.constant 0.000000e+00 : f32
    %15 = vector.broadcast %cst_13 : f32 to vector<16x128xf32>
    %16 = arith.maximumf %14, %15 : vector<16x128xf32>
    %cst_14 = arith.constant dense<0.000000e+00> : vector<8x128xf32>
    %17 = tpu.matmul %1, %16, %cst_14 {dimension_numbers = #tpu.dot_dimension_numbers<[1], [0], [0], [1], [0, 0, 1, 1], [], []>} : vector<8x16xf32>, vector<16x128xf32>, vector<8x128xf32> -> vector<8x128xf32>
    %cst_15 = arith.constant 0.000000e+00 : f32
    %18 = vector.broadcast %cst_15 : f32 to vector<8x128xf32>
    %19 = arith.maximumf %17, %18 : vector<8x128xf32>
    %cst_16 = arith.constant dense<0.000000e+00> : vector<128xf32>
    %20 = vector.multi_reduction <add>, %19, %cst_16 [0] : vector<8x128xf32> to vector<128xf32>
    %21 = vector.shape_cast %20 : vector<128xf32> to vector<1x128xf32>
    %22 = tpu.concatenate %11, %21 in 0 : vector<1x128xf32>, vector<1x128xf32> -> vector<2x128xf32>
    %c0_17 = arith.constant 0 : index
    %c0_18 = arith.constant 0 : index
    %23 = vector.load %arg5[%c0_17, %c0_18] : memref<2x128xf32, #tpu.memory_space<vmem>>, vector<2x128xf32>
    tpu.vector_store %arg5[%c0_17, %c0_18], %22 {strides = array<i32>} : memref<2x128xf32, #tpu.memory_space<vmem>>, vector<2x128xf32>,
    return
  }
  func.func @transform_0(%arg0: i32, %arg1: i32) -> (i32, i32, i32) {
    %c0_i32 = arith.constant 0 : i32
    %c0_i32_0 = arith.constant 0 : i32
    return %arg0, %c0_i32, %arg1 : i32, i32, i32
  }
  func.func @transform_1(%arg0: i32, %arg1: i32) -> (i32, i32) {
    %c0_i32 = arith.constant 0 : i32
    %c0_i32_0 = arith.constant 0 : i32
    %c0_i32_1 = arith.constant 0 : i32
    return %c0_i32, %c0_i32_0 : i32, i32
  }
  func.func @transform_2(%arg0: i32, %arg1: i32) -> (i32, i32) {
    %c0_i32 = arith.constant 0 : i32
    %c0_i32_0 = arith.constant 0 : i32
    %c0_i32_1 = arith.constant 0 : i32
    return %c0_i32, %c0_i32_0 : i32, i32
  }
  func.func @transform_3(%arg0: i32, %arg1: i32) -> (i32, i32) {
    %c0_i32 = arith.constant 0 : i32
    return %arg0, %arg1 : i32, i32
  }
}

</mosaic_0001>

<llo_original>
// kernel: tpu_custom_call.1
$region0: #{tpu_custom_call.1}
  #allocation0 [shape = 'u32[]', space=smem, size = 0x4, offset = 0x4, fixed_abs, tag = 'smem constant byte address 0x4 - core index']
  #allocation1 [shape = 'u32[72,128]{1,0:T(1,128)}', space=vmem, size = 0x9000, scoped, tag = 'internal scratch']
  %s0 = inlined_call_operand.hbm [shape: f32[2,32,128], index: 0, kind: input, shape index: {}]
  %s1 = inlined_call_operand.hbm [shape: f32[16,32], index: 1, kind: input, shape index: {}]
  %s2 = inlined_call_operand.hbm [shape: f32[8,16], index: 2, kind: input, shape index: {}]
  %s3 = inlined_call_operand.hbm [shape: f32[2,128], index: 3, kind: output, shape index: {}]
  %s4 = sld [smem:[#allocation0]]
  $region34: #{tpu_custom_call.1} parent=0
    _
  %s6 = ssub.s32 1, %s4
  %s7 = scalar_select 0, %s6, %s4
  $region1: #{tpu_custom_call.1} parent=0
    #allocation2 [shape = 'u8[32768]{0}', space=vmem, size = 0x8000, scoped, tag = 'input window, operand 0, single buffered']
    #allocation3 [shape = 's32[1]{0}', space=sflag, size = 0x4, scoped, tag = 'scoped memory for tpu_custom_call.1']
    #allocation4 [shape = 's32[1]{0}', space=sflag, size = 0x4, scoped, tag = 'scoped memory for tpu_custom_call.1']
    #allocation5 [shape = 'u8[8192]{0}', space=vmem, size = 0x2000, scoped, tag = 'input window, operand 1, single buffered']
    #allocation6 [shape = 's32[1]{0}', space=sflag, size = 0x4, scoped, tag = 'scoped memory for tpu_custom_call.1']
    #allocation7 [shape = 'u8[4096]{0}', space=vmem, size = 0x1000, scoped, tag = 'input window, operand 2, single buffered']
    #allocation8 [shape = 'u8[1024]{0}', space=vmem, size = 0x400, scoped, tag = 'output window, operand 0, single buffered']
    %8 = vsyncpa [#allocation3], 0
    %9 = vsyncpa [#allocation6], 0
    %10 = vsyncpa [#allocation4], 0
    // Predicated region
    $region2: #{tpu_custom_call.1} parent=1 // pred_check
      _
    $region3: #{tpu_custom_call.1} parent=1 // pred_check_branch
      %12 = sbr.rel (0) target = $region5
    $region4: #{tpu_custom_call.1} parent=1 // pred_region
      %14 = vsyncadd [#allocation3], 0
      %s15 = sshll.u32 %s0, 4
      %s16 = int_to_ptr.hbm [resolvable:$true] %s15
      %s17 = sshll.u32 [#allocation2], 4
      %s18 = int_to_ptr.vmem [resolvable:$true] %s17
      %23 = dma.hbm_to_vmem [thread:$0]  %s16, 1024, %s18, [#allocation3], 128, 128, 8
    $region5: #{tpu_custom_call.1} parent=1 // pred_fallthru
      _
    // Predicated region
    $region6: #{tpu_custom_call.1} parent=1 // pred_check
      _
    $region7: #{tpu_custom_call.1} parent=1 // pred_check_branch
      %25 = sbr.rel (0) target = $region9
    $region8: #{tpu_custom_call.1} parent=1 // pred_region
      %27 = vsyncadd [#allocation6], 0
      %s28 = sshll.u32 %s1, 4
      %s29 = int_to_ptr.hbm [resolvable:$true] %s28
      %s30 = sshll.u32 [#allocation5], 4
      %s31 = int_to_ptr.vmem [resolvable:$true] %s30
      %36 = dma.hbm_to_vmem [thread:$0]  %s29, 256, %s31, [#allocation6], 128, 128, 8
    $region9: #{tpu_custom_call.1} parent=1 // pred_fallthru
      _
    // Predicated region
    $region10: #{tpu_custom_call.1} parent=1 // pred_check
      _
    $region11: #{tpu_custom_call.1} parent=1 // pred_check_branch
      %38 = sbr.rel (0) target = $region13
    $region12: #{tpu_custom_call.1} parent=1 // pred_region
      %40 = vsyncadd [#allocation6], 0
      %s42 = sshll.u32 %s2, 4
      %s43 = int_to_ptr.hbm [resolvable:$true] %s42
      %s44 = sshll.u32 [#allocation7], 4
      %s45 = int_to_ptr.vmem [resolvable:$true] %s44
      %47 = dma.hbm_to_vmem [thread:$0]  %s43, 128, %s45, [#allocation6]
    $region13: #{tpu_custom_call.1} parent=1 // pred_fallthru
      _
    // Predicated region
    $region14: #{tpu_custom_call.1} parent=1 // pred_check
      _
    $region15: #{tpu_custom_call.1} parent=1 // pred_check_branch
      %49 = sbr.rel (0) target = $region17
    $region16: #{tpu_custom_call.1} parent=1 // pred_region
      %51 = dma.done [#allocation3], 1024
    $region17: #{tpu_custom_call.1} parent=1 // pred_fallthru
      _
    // Predicated region
    $region18: #{tpu_custom_call.1} parent=1 // pred_check
      _
    $region19: #{tpu_custom_call.1} parent=1 // pred_check_branch
      %53 = sbr.rel (0) target = $region21
    $region20: #{tpu_custom_call.1} parent=1 // pred_region
      %55 = dma.done [#allocation6], 256
    $region21: #{tpu_custom_call.1} parent=1 // pred_fallthru
      _
    // Predicated region
    $region22: #{tpu_custom_call.1} parent=1 // pred_check
      _
    $region23: #{tpu_custom_call.1} parent=1 // pred_check_branch
      %57 = sbr.rel (0) target = $region25
    $region24: #{tpu_custom_call.1} parent=1 // pred_region
      %59 = dma.done [#allocation6], 128
    $region25: #{tpu_custom_call.1} parent=1 // pred_fallthru
      _
    %v60 = vld [vmem:[#allocation5] sm:$0xff]
    %v61 = vld [vmem:[#allocation5 + $0x8] sm:$0xff]
    %v62 = vld [vmem:[#allocation7] sm:$0xff]
    %v63 = vld [vmem:[#allocation2] sm:$0xff]
    %v64 = vld [vmem:[#allocation2 + $0x8] sm:$0xff]
    %v65 = vld [vmem:[#allocation2 + $0x10] sm:$0xff]
    %v66 = vld [vmem:[#allocation2 + $0x18] sm:$0xff]
    %vm67 = vcmask 261120
    %v69 = vsel %vm67, %v60, 0
    %v72 = vsel %vm67, %v61, 0
    %74 = vmatpush.msra.mxu0 0.0
    %75 = vmatpush.msra.mxu0 0.0
    %76 = vmatpush.msra.mxu0 0.0
    %77 = vmatpush.msra.mxu0 0.0
    %78 = vmatpush.msra.mxu0 0.0
    %79 = vmatpush.msra.mxu0 0.0
    %80 = vmatpush.msra.mxu0 0.0
    %81 = vmatpush.msra.mxu0 0.0
    %82 = vmatpush.msra.mxu0 0.0
    %83 = vmatpush.msra.mxu0 0.0
    %84 = vmatpush.msra.mxu0 0.0
    %85 = vmatpush.msra.mxu0 0.0
    %86 = vmatpush.msra.mxu0 %v66
    %87 = vmatpush.msra.mxu0 %v65
    %88 = vmatpush.msra.mxu0 %v64
    %89 = vmatpush.msra.mxu0 %v63
    %90 = vmatmul.f32.gmra.mxu0 %v69
    %v91 = vpop.f32.mrf.mxu0
    %v92 = vadd.f32 0.0, %v91
    %93 = vmatmul.f32.gmra.mxu0 %v72
    %v94 = vpop.f32.mrf.mxu0
    %v95 = vadd.f32 0.0, %v94
    %96 = vdwg.mxu0
    %v97 = vmax.f32 %v92, 0.0
    %v98 = vmax.f32 %v95, 0.0
    %vm99 = vcmask 130048
    %v101 = vsel %vm99, %v62, 0
    %103 = vmatpush.msra.mxu0 0.0
    %104 = vmatpush.msra.mxu0 0.0
    %105 = vmatpush.msra.mxu0 0.0
    %106 = vmatpush.msra.mxu0 0.0
    %107 = vmatpush.msra.mxu0 0.0
    %108 = vmatpush.msra.mxu0 0.0
    %109 = vmatpush.msra.mxu0 0.0
    %110 = vmatpush.msra.mxu0 0.0
    %111 = vmatpush.msra.mxu0 0.0
    %112 = vmatpush.msra.mxu0 0.0
    %113 = vmatpush.msra.mxu0 0.0
    %114 = vmatpush.msra.mxu0 0.0
    %115 = vmatpush.msra.mxu0 0.0
    %116 = vmatpush.msra.mxu0 0.0
    %117 = vmatpush.msra.mxu0 %v98
    %118 = vmatpush.msra.mxu0 %v97
    %119 = vmatmul.f32.gmra.mxu0 %v101
    %v120 = vpop.f32.mrf.mxu0
    %v121 = vadd.f32 0.0, %v120
    %122 = vdwg.mxu0
    %v123 = vmax.f32 %v121, 0.0
    %v124 = vrot.slane %v123, 4
    %v125 = vadd.f32 %v123, %v124
    %v126 = vrot.slane %v125, 2
    %v127 = vadd.f32 %v125, %v126
    %v128 = vrot.slane %v127, 1
    %v129 = vadd.f32 %v127, %v128
    %s130 = scalar_lea.vmem [#allocation2], 32
    %v131 = vld [vmem:[%s130] sm:$0xff]
    %v132 = vld [vmem:[%s130 + $0x8] sm:$0xff]
    %v133 = vld [vmem:[%s130 + $0x10] sm:$0xff]
    %v134 = vld [vmem:[%s130 + $0x18] sm:$0xff]
    %135 = vmatpush.msra.mxu0 0.0
    %136 = vmatpush.msra.mxu0 0.0
    %137 = vmatpush.msra.mxu0 0.0
    %138 = vmatpush.msra.mxu0 0.0
    %139 = vmatpush.msra.mxu0 0.0
    %140 = vmatpush.msra.mxu0 0.0
    %141 = vmatpush.msra.mxu0 0.0
    %142 = vmatpush.msra.mxu0 0.0
    %143 = vmatpush.msra.mxu0 0.0
    %144 = vmatpush.msra.mxu0 0.0
    %145 = vmatpush.msra.mxu0 0.0
    %146 = vmatpush.msra.mxu0 0.0
    %147 = vmatpush.msra.mxu0 %v134
    %148 = vmatpush.msra.mxu0 %v133
    %149 = vmatpush.msra.mxu0 %v132
    %150 = vmatpush.msra.mxu0 %v131
    %151 = vmatmul.f32.gmra.mxu0 %v69
    %v152 = vpop.f32.mrf.mxu0
    %v153 = vadd.f32 0.0, %v152
    %154 = vmatmul.f32.gmra.mxu0 %v72
    %v155 = vpop.f32.mrf.mxu0
    %v156 = vadd.f32 0.0, %v155
    %157 = vdwg.mxu0
    %v158 = vmax.f32 %v153, 0.0
    %v159 = vmax.f32 %v156, 0.0
    %160 = vmatpush.msra.mxu0 0.0
    %161 = vmatpush.msra.mxu0 0.0
    %162 = vmatpush.msra.mxu0 0.0
    %163 = vmatpush.msra.mxu0 0.0
    %164 = vmatpush.msra.mxu0 0.0
    %165 = vmatpush.msra.mxu0 0.0
    %166 = vmatpush.msra.mxu0 0.0
    %167 = vmatpush.msra.mxu0 0.0
    %168 = vmatpush.msra.mxu0 0.0
    %169 = vmatpush.msra.mxu0 0.0
    %170 = vmatpush.msra.mxu0 0.0
    %171 = vmatpush.msra.mxu0 0.0
    %172 = vmatpush.msra.mxu0 0.0
    %173 = vmatpush.msra.mxu0 0.0
    %174 = vmatpush.msra.mxu0 %v159
    %175 = vmatpush.msra.mxu0 %v158
    %176 = vmatmul.f32.gmra.mxu0 %v101
    %v177 = vpop.f32.mrf.mxu0
    %v178 = vadd.f32 0.0, %v177
    %179 = vdwg.mxu0
    %v180 = vmax.f32 %v178, 0.0
    %v181 = vrot.slane %v180, 4
    %v182 = vadd.f32 %v180, %v181
    %v183 = vrot.slane %v182, 2
    %v184 = vadd.f32 %v182, %v183
    %v185 = vrot.slane %v184, 1
    %v186 = vadd.f32 %v184, %v185
    %vm187 = vcmask 1040384
    %v188 = vsel %vm187, %v129, %v186
    %189 = vst [vmem:[#allocation8] sm:$0x3] %v188
    // Predicated region
    $region26: #{tpu_custom_call.1} parent=1 // pred_check
      _
    $region27: #{tpu_custom_call.1} parent=1 // pred_check_branch
      %191 = sbr.rel (0) target = $region29
    $region28: #{tpu_custom_call.1} parent=1 // pred_region
      %193 = vsyncadd [#allocation4], 0
      %s195 = sshll.u32 [#allocation8], 4
      %s196 = int_to_ptr.vmem [resolvable:$true] %s195
      %s197 = sshll.u32 %s3, 4
      %s198 = int_to_ptr.hbm [resolvable:$true] %s197
      %200 = dma.vmem_to_hbm [thread:$0]  %s196, 32, %s198, [#allocation4]
    $region29: #{tpu_custom_call.1} parent=1 // pred_fallthru
      _
    // Predicated region
    $region30: #{tpu_custom_call.1} parent=1 // pred_check
      _
    $region31: #{tpu_custom_call.1} parent=1 // pred_check_branch
      %202 = sbr.rel (0) target = $region33
    $region32: #{tpu_custom_call.1} parent=1 // pred_region
      %204 = dma.done [#allocation4], 32
    $region33: #{tpu_custom_call.1} parent=1 // pred_fallthru
      _
    %205 = vsyncpa [#allocation3], 1
    %206 = vsyncpa [#allocation6], 1
    %207 = vsyncpa [#allocation4], 1

</llo_original>
